<compile_context>
chip_gen: v5e
topology: v5e:2x2
jax: 0.10.0
libtpu: 0.0.40
codegen_flags: <defaults>
</compile_context>

<pallas_src>
import jax
import jax.numpy as jnp
from jax import lax
from jax.experimental import pallas as pl
from jax.experimental.pallas import tpu as pltpu

LEAKY_SLOPE = 0.1
BN_EPS = 1e-5


def _leaky_relu(x):
    return jnp.where(x >= 0, x, LEAKY_SLOPE * x)


def conv_block_kernel(xp_ref, w1_ref, b1_ref, w2_ref, b2_ref, o_ref):
    """One batch element per grid step; (width, channel) fused on the lane axis.

    xp_ref : (1, H+2, (W+2)*C)    zero-padded input, each row flattened as (w, c)
    w1_ref : (3*(W+2)*C, (W+2)*C) conv1 banded/Toeplitz weight, BN1 scale folded in;
                                  its pad output columns are zero, so the result is
                                  already width-padded for conv2.
    b1_ref : (1, (W+2)*C)         BN1 shift (zero on the pad columns)
    w2_ref : (3*(W+2)*C, W*C)     conv2 banded/Toeplitz weight, BN2 scale folded in
    b2_ref : (1, W*C)             BN2 shift
    o_ref  : (1, H, W*C)          lane-dense output slab
    """
    H = o_ref.shape[1]
    xp = xp_ref[0]                                            # (H+2, WpC)

    # ---- conv1 + BN1 + LeakyReLU as a single im2col matmul -------------------
    # Row h of cols1 = padded rows (h, h+1, h+2) concatenated along lanes.
    cols1 = jnp.concatenate([xp[0:H], xp[1:H + 1], xp[2:H + 2]], axis=1)
    y = _leaky_relu(
        jnp.dot(cols1, w1_ref[...], preferred_element_type=jnp.float32)
        + b1_ref[...])                                        # (H, WpC); pad cols == 0

    # ---- height-pad the intermediate with value-level zero rows --------------
    # (no VMEM scratch, no per-step re-zeroing, no masked partial stores)
    zrow = jnp.zeros((1, y.shape[1]), y.dtype)
    yp = jnp.concatenate([zrow, y, zrow], axis=0)             # (H+2, WpC)

    # ---- conv2 + BN2 + LeakyReLU, same single-matmul im2col ------------------
    cols2 = jnp.concatenate([yp[0:H], yp[1:H + 1], yp[2:H + 2]], axis=1)
    z = _leaky_relu(
        jnp.dot(cols2, w2_ref[...], preferred_element_type=jnp.float32)
        + b2_ref[...])                                        # (H, W*C)

    o_ref[0] = z.astype(o_ref.dtype)


def fold_bn(gamma, beta, running_mean, running_var, eps=BN_EPS):
    scale = gamma / jnp.sqrt(running_var + eps)
    shift = beta - running_mean * scale
    return scale, shift


def _toeplitz_weight(w, scale, W, pad_out):
    """(Cout, Cin, 3, 3) PyTorch conv weight -> banded matmul weight that acts on a
    lane-flattened triple of width-padded rows.  BN scale folded on the cout axis.

    Row index  = dh*(Wp*C) + p*C + cin     (p = padded input x-position)
    Col index  = q*C + cout                (q = padded output x-pos if pad_out,
                                            else unpadded output x-pos)
    """
    C = w.shape[0]
    Wp = W + 2
    ws = (w * scale[:, None, None, None]).astype(jnp.float32)   # fold BN scale
    dw = jnp.arange(3)[:, None, None]
    p = jnp.arange(Wp)[None, :, None]
    j = jnp.arange(W)[None, None, :]
    ind = (p == j + dw).astype(jnp.float32)                     # (3, Wp, W) band mask
    # wb[dh, p, cin, j, cout] = w[cout, cin, dh, p - j]   (0 outside the band)
    wb = jnp.einsum('apj,oiha->hpijo', ind, ws)                 # (3, Wp, C, W, C)
    if pad_out:
        # zero output columns for the width-pad positions of the intermediate
        wb = jnp.pad(wb, ((0, 0), (0, 0), (0, 0), (1, 1), (0, 0)))
    ncol = (Wp if pad_out else W) * C
    return wb.reshape(3 * Wp * C, ncol)


@jax.jit
def conv_module_forward(x_nchw, w1, w2, bn1, bn2):
    """Equivalent of the PyTorch `conv` module's forward (which returns the conv-path
    output `x`; the residual add / final relu are computed then discarded).

    x_nchw : (N, C, H, W) float32
    w1, w2 : (C, C, 3, 3)  PyTorch-layout conv weights (out, in, kh, kw)
    bn1/bn2: dicts with gamma, beta, mean, var  each (C,)
    """
    N, C, H, W = x_nchw.shape
    Wp = W + 2

    # NCHW -> NHWC, zero-pad spatially by 1, fuse (W, C) onto the lane axis.
    x_nhwc = jnp.transpose(x_nchw, (0, 2, 3, 1))
    x_pad = jnp.pad(x_nhwc, ((0, 0), (1, 1), (1, 1), (0, 0)))
    x_flat = x_pad.reshape(N, H + 2, Wp * C).astype(jnp.float32)

    s1, sh1 = fold_bn(bn1["gamma"], bn1["beta"], bn1["mean"], bn1["var"])
    s2, sh2 = fold_bn(bn2["gamma"], bn2["beta"], bn2["mean"], bn2["var"])

    w1_big = _toeplitz_weight(w1, s1, W, pad_out=True)     # (3*Wp*C, Wp*C)
    w2_big = _toeplitz_weight(w2, s2, W, pad_out=False)    # (3*Wp*C, W*C)

    zc = jnp.zeros((C,), jnp.float32)
    b1_flat = jnp.concatenate(
        [zc, jnp.tile(sh1.astype(jnp.float32), W), zc]).reshape(1, Wp * C)
    b2_flat = jnp.tile(sh2.astype(jnp.float32), W).reshape(1, W * C)

    out_flat = pl.pallas_call(
        conv_block_kernel,
        out_shape=jax.ShapeDtypeStruct((N, H, W * C), jnp.float32),
        grid_spec=pltpu.PrefetchScalarGridSpec(
            num_scalar_prefetch=0,
            grid=(N,),
            in_specs=[
                pl.BlockSpec((1, H + 2, Wp * C), lambda b: (b, 0, 0)),
                pl.BlockSpec((3 * Wp * C, Wp * C), lambda b: (0, 0)),
                pl.BlockSpec((1, Wp * C), lambda b: (0, 0)),
                pl.BlockSpec((3 * Wp * C, W * C), lambda b: (0, 0)),
                pl.BlockSpec((1, W * C), lambda b: (0, 0)),
            ],
            out_specs=pl.BlockSpec((1, H, W * C), lambda b: (b, 0, 0)),
        ),
        compiler_params=pltpu.CompilerParams(
            dimension_semantics=("parallel",),
            vmem_limit_bytes=32 * 1024 * 1024),
    )(x_flat, w1_big, b1_flat, w2_big, b2_flat)

    # (N, H, W*C) -> (N, C, H, W) to match PyTorch output layout.
    return jnp.transpose(out_flat.reshape(N, H, W, C), (0, 3, 1, 2))


def _reference_forward(x_nchw, w1, w2, bn1, bn2):
    """Pure-JAX reference (lax.conv) for correctness check, NCHW throughout."""
    def conv3x3(x, w):
        return lax.conv_general_dilated(
            x, w, window_strides=(1, 1), padding=((1, 1), (1, 1)),
            dimension_numbers=("NCHW", "OIHW", "NCHW"))

    def bn(x, p):
        scale, shift = fold_bn(p["gamma"], p["beta"], p["mean"], p["var"])
        return x * scale[None, :, None, None] + shift[None, :, None, None]

    y = _leaky_relu(bn(conv3x3(x_nchw, w1), bn1))
    z = _leaky_relu(bn(conv3x3(y, w2), bn2))
    return z  # module returns the conv-path output (residual add is discarded)


if __name__ == "__main__":
    key = jax.random.PRNGKey(0)
    k_x, k_w1, k_w2, k_g1, k_b1, k_m1, k_v1, k_g2, k_b2, k_m2, k_v2 = (
        jax.random.split(key, 11))

    # The module requires in_c == out_c for its first conv; pick C=4.
    N, C, H, W = 2, 4, 16, 16

    x = jax.random.normal(k_x, (N, C, H, W), dtype=jnp.float32)
    # Deterministic synthetic weights (PyTorch layout: out, in, kh, kw).
    w1 = jax.random.normal(k_w1, (C, C, 3, 3), dtype=jnp.float32) * 0.1
    w2 = jax.random.normal(k_w2, (C, C, 3, 3), dtype=jnp.float32) * 0.1

    # Eval-mode BatchNorm with non-trivial statistics (exercises the scale fold).
    bn1 = {"gamma": 1.0 + 0.1 * jax.random.normal(k_g1, (C,), jnp.float32),
           "beta": 0.1 * jax.random.normal(k_b1, (C,), jnp.float32),
           "mean": 0.1 * jax.random.normal(k_m1, (C,), jnp.float32),
           "var": jax.random.uniform(k_v1, (C,), jnp.float32, 0.5, 1.5)}
    bn2 = {"gamma": 1.0 + 0.1 * jax.random.normal(k_g2, (C,), jnp.float32),
           "beta": 0.1 * jax.random.normal(k_b2, (C,), jnp.float32),
           "mean": 0.1 * jax.random.normal(k_m2, (C,), jnp.float32),
           "var": jax.random.uniform(k_v2, (C,), jnp.float32, 0.5, 1.5)}

    out = conv_module_forward(x, w1, w2, bn1, bn2)
    out = jax.block_until_ready(out)

    ref = _reference_forward(x, w1, w2, bn1, bn2)
    ref = jax.block_until_ready(ref)

    assert out.shape == (N, C, H, W), out.shape
    assert jnp.allclose(out, ref, atol=1e-4, rtol=1e-4), (
        float(jnp.max(jnp.abs(out - ref))))

    print("KERNEL_OK")
</pallas_src>

<mosaic_0001>
module attributes {stable_mosaic.version = 11 : i64} {
  func.func @conv_block_kernel(%arg0: i32, %arg1: memref<1x18x72xf32, #tpu.memory_space<vmem>>, %arg2: memref<216x72xf32, #tpu.memory_space<vmem>>, %arg3: memref<1x72xf32, #tpu.memory_space<vmem>>, %arg4: memref<216x64xf32, #tpu.memory_space<vmem>>, %arg5: memref<1x64xf32, #tpu.memory_space<vmem>>, %arg6: memref<1x16x64xf32, #tpu.memory_space<vmem>>) attributes {dimension_semantics = [#tpu.dimension_semantics<parallel>], iteration_bounds = array<i64: 2>, scalar_prefetch = 0 : i64, scratch_operands = 0 : i64, tpu.core_type = #tpu.core_type<tc>, window_params = [{transform_indices = @transform_0, window_bounds = array<i64: 1, 18, 72>}, {pipeline_mode = #tpu.pipeline_mode<synchronous>, transform_indices = @transform_1, window_bounds = array<i64: 216, 72>}, {pipeline_mode = #tpu.pipeline_mode<synchronous>, transform_indices = @transform_2, window_bounds = array<i64: 1, 72>}, {pipeline_mode = #tpu.pipeline_mode<synchronous>, transform_indices = @transform_3, window_bounds = array<i64: 216, 64>}, {pipeline_mode = #tpu.pipeline_mode<synchronous>, transform_indices = @transform_4, window_bounds = array<i64: 1, 64>}, {transform_indices = @transform_5, window_bounds = array<i64: 1, 16, 64>}]} {
    %c0 = arith.constant 0 : index
    %c0_0 = arith.constant 0 : index
    %c0_1 = arith.constant 0 : index
    %0 = vector.load %arg1[%c0, %c0_0, %c0_1] : memref<1x18x72xf32, #tpu.memory_space<vmem>>, vector<1x18x72xf32>
    %1 = vector.shape_cast %0 : vector<1x18x72xf32> to vector<18x72xf32>
    %2 = vector.extract_strided_slice %1 {offsets = [0, 0], sizes = [16, 72], strides = [1, 1]} : vector<18x72xf32> to vector<16x72xf32>
    %3 = vector.extract_strided_slice %1 {offsets = [1, 0], sizes = [16, 72], strides = [1, 1]} : vector<18x72xf32> to vector<16x72xf32>
    %4 = vector.extract_strided_slice %1 {offsets = [2, 0], sizes = [16, 72], strides = [1, 1]} : vector<18x72xf32> to vector<16x72xf32>
    %5 = tpu.concatenate %2, %3, %4 in 1 : vector<16x72xf32>, vector<16x72xf32>, vector<16x72xf32> -> vector<16x216xf32>
    %c0_2 = arith.constant 0 : index
    %c0_3 = arith.constant 0 : index
    %6 = vector.load %arg2[%c0_2, %c0_3] : memref<216x72xf32, #tpu.memory_space<vmem>>, vector<216x72xf32>
    %cst = arith.constant dense<0.000000e+00> : vector<16x72xf32>
    %7 = tpu.matmul %5, %6, %cst {dimension_numbers = #tpu.dot_dimension_numbers<[1], [0], [0], [1], [0, 0, 1, 1], [], []>} : vector<16x216xf32>, vector<216x72xf32>, vector<16x72xf32> -> vector<16x72xf32>
    %c0_4 = arith.constant 0 : index
    %c0_5 = arith.constant 0 : index
    %8 = vector.load %arg3[%c0_4, %c0_5] : memref<1x72xf32, #tpu.memory_space<vmem>>, vector<1x72xf32>
    %9 = vector.broadcast %8 : vector<1x72xf32> to vector<16x72xf32>
    %10 = arith.addf %7, %9 : vector<16x72xf32>
    %cst_6 = arith.constant 0.000000e+00 : f32
    %11 = vector.broadcast %cst_6 : f32 to vector<16x72xf32>
    %12 = arith.cmpf oge, %10, %11 : vector<16x72xf32>
    %cst_7 = arith.constant 1.000000e-01 : f32
    %13 = vector.broadcast %cst_7 : f32 to vector<16x72xf32>
    %14 = arith.mulf %13, %10 : vector<16x72xf32>
    %15 = arith.select %12, %10, %14 : vector<16x72xi1>, vector<16x72xf32>
    %cst_8 = arith.constant 0.000000e+00 : f32
    %16 = vector.broadcast %cst_8 : f32 to vector<1x72xf32>
    %17 = tpu.concatenate %16, %15, %16 in 0 : vector<1x72xf32>, vector<16x72xf32>, vector<1x72xf32> -> vector<18x72xf32>
    %18 = vector.extract_strided_slice %17 {offsets = [0, 0], sizes = [16, 72], strides = [1, 1]} : vector<18x72xf32> to vector<16x72xf32>
    %19 = vector.extract_strided_slice %17 {offsets = [1, 0], sizes = [16, 72], strides = [1, 1]} : vector<18x72xf32> to vector<16x72xf32>
    %20 = vector.extract_strided_slice %17 {offsets = [2, 0], sizes = [16, 72], strides = [1, 1]} : vector<18x72xf32> to vector<16x72xf32>
    %21 = tpu.concatenate %18, %19, %20 in 1 : vector<16x72xf32>, vector<16x72xf32>, vector<16x72xf32> -> vector<16x216xf32>
    %c0_9 = arith.constant 0 : index
    %c0_10 = arith.constant 0 : index
    %22 = vector.load %arg4[%c0_9, %c0_10] : memref<216x64xf32, #tpu.memory_space<vmem>>, vector<216x64xf32>
    %cst_11 = arith.constant dense<0.000000e+00> : vector<16x64xf32>
    %23 = tpu.matmul %21, %22, %cst_11 {dimension_numbers = #tpu.dot_dimension_numbers<[1], [0], [0], [1], [0, 0, 1, 1], [], []>} : vector<16x216xf32>, vector<216x64xf32>, vector<16x64xf32> -> vector<16x64xf32>
    %c0_12 = arith.constant 0 : index
    %c0_13 = arith.constant 0 : index
    %24 = vector.load %arg5[%c0_12, %c0_13] : memref<1x64xf32, #tpu.memory_space<vmem>>, vector<1x64xf32>
    %25 = vector.broadcast %24 : vector<1x64xf32> to vector<16x64xf32>
    %26 = arith.addf %23, %25 : vector<16x64xf32>
    %cst_14 = arith.constant 0.000000e+00 : f32
    %27 = vector.broadcast %cst_14 : f32 to vector<16x64xf32>
    %28 = arith.cmpf oge, %26, %27 : vector<16x64xf32>
    %cst_15 = arith.constant 1.000000e-01 : f32
    %29 = vector.broadcast %cst_15 : f32 to vector<16x64xf32>
    %30 = arith.mulf %29, %26 : vector<16x64xf32>
    %31 = arith.select %28, %26, %30 : vector<16x64xi1>, vector<16x64xf32>
    %c0_16 = arith.constant 0 : index
    %c0_17 = arith.constant 0 : index
    %c0_18 = arith.constant 0 : index
    %32 = vector.load %arg6[%c0_16, %c0_17, %c0_18] : memref<1x16x64xf32, #tpu.memory_space<vmem>>, vector<1x16x64xf32>
    %33 = vector.shape_cast %32 : vector<1x16x64xf32> to vector<16x64xf32>
    %34 = vector.shape_cast %31 : vector<16x64xf32> to vector<1x16x64xf32>
    tpu.vector_store %arg6[%c0_16, %c0_17, %c0_18], %34 {strides = array<i32>} : memref<1x16x64xf32, #tpu.memory_space<vmem>>, vector<1x16x64xf32>,
    return
  }
  func.func @transform_0(%arg0: i32) -> (i32, i32, i32) {
    %c0_i32 = arith.constant 0 : i32
    %c0_i32_0 = arith.constant 0 : i32
    %c0_i32_1 = arith.constant 0 : i32
    return %arg0, %c0_i32, %c0_i32_0 : i32, i32, i32
  }
  func.func @transform_1(%arg0: i32) -> (i32, i32) {
    %c0_i32 = arith.constant 0 : i32
    %c0_i32_0 = arith.constant 0 : i32
    %c0_i32_1 = arith.constant 0 : i32
    return %c0_i32, %c0_i32_0 : i32, i32
  }
  func.func @transform_2(%arg0: i32) -> (i32, i32) {
    %c0_i32 = arith.constant 0 : i32
    %c0_i32_0 = arith.constant 0 : i32
    %c0_i32_1 = arith.constant 0 : i32
    return %c0_i32, %c0_i32_0 : i32, i32
  }
  func.func @transform_3(%arg0: i32) -> (i32, i32) {
    %c0_i32 = arith.constant 0 : i32
    %c0_i32_0 = arith.constant 0 : i32
    %c0_i32_1 = arith.constant 0 : i32
    return %c0_i32, %c0_i32_0 : i32, i32
  }
  func.func @transform_4(%arg0: i32) -> (i32, i32) {
    %c0_i32 = arith.constant 0 : i32
    %c0_i32_0 = arith.constant 0 : i32
    %c0_i32_1 = arith.constant 0 : i32
    return %c0_i32, %c0_i32_0 : i32, i32
  }
  func.func @transform_5(%arg0: i32) -> (i32, i32, i32) {
    %c0_i32 = arith.constant 0 : i32
    %c0_i32_0 = arith.constant 0 : i32
    %c0_i32_1 = arith.constant 0 : i32
    return %arg0, %c0_i32, %c0_i32_0 : i32, i32, i32
  }
}

</mosaic_0001>

<llo_original>
// kernel: tile.13
$region0: #{tile.13}
  #allocation0 [shape = 's32[1]{0}', space=sflag, size = 0x4, scoped, tag = 'scoped memory for tile.13']
  %s0 = inlined_call_operand.vmem [shape: f32[4], index: 0, kind: input, shape index: {}]
  %s1 = inlined_call_operand.vmem [shape: f32[16,4], index: 1, kind: output, shape index: {}]
  // Predicated region
  $region2: #{tile.13} parent=0 // pred_check
    _
  $region3: #{tile.13} parent=0 // pred_check_branch
    %3 = sbr.rel (0) target = $region5
  $region4: #{tile.13} parent=0 // pred_region
    _
  $region5: #{tile.13} parent=0 // pred_fallthru
    _
  %v4 = vld [vmem:[%s0] ss:$0 sm:$0xff]
  %5 = vst [vmem:[%s1] sm:$0xff] %v4
  %s6 = scalar_lea.vmem %s1, 8
  %7 = vst [vmem:[%s6] sm:$0xff] %v4

// kernel: tile.14
$region0: #{tile.14}
  %s0 = inlined_call_operand.vmem [shape: f32[16,4], index: 0, kind: input, shape index: {}]
  %s1 = inlined_call_operand.vmem [shape: f32[64], index: 1, kind: output, shape index: {}]
  $region1: #{tile.14} parent=0
    #allocation0 [shape = 'u8[4096]{0}', space=vmem, size = 0x1000, scoped, tag = 'scoped mem for output reshape']
    %v2 = vld [vmem:[%s0] sm:$0x1]
    %vm3 = vcmask 31744
    %4 = vst.msk [vmem:[#allocation0] sm:$0x1] %vm3, %v2
    %s5 = scalar_lea.vmem %s0, 15
    %v6 = vld [vmem:[%s5] sm:$0x1]
    %7 = vrot.lane.b32.xlu0 %v6, 60
    %v8 = vpop.permute.xlu0 %7
    %vm9 = vcmask 523744
    %10 = vst.msk [vmem:[#allocation0] sm:$0x1] %vm9, %v8
    %s11 = scalar_lea.vmem %s0, 14
    %v12 = vld [vmem:[%s11] sm:$0x1]
    %13 = vrot.lane.b32.xlu0 %v12, 56
    %v14 = vpop.permute.xlu0 %13
    %vm15 = vcmask 490944
    %16 = vst.msk [vmem:[#allocation0] sm:$0x1] %vm15, %v14
    %s17 = scalar_lea.vmem %s0, 13
    %v18 = vld [vmem:[%s17] sm:$0x1]
    %19 = vrot.lane.b32.xlu0 %v18, 52
    %v20 = vpop.permute.xlu0 %19
    %vm21 = vcmask 458144
    %22 = vst.msk [vmem:[#allocation0] sm:$0x1] %vm21, %v20
    %s23 = scalar_lea.vmem %s0, 12
    %v24 = vld [vmem:[%s23] sm:$0x1]
    %25 = vrot.lane.b32.xlu0 %v24, 48
    %v26 = vpop.permute.xlu0 %25
    %vm27 = vcmask 425344
    %28 = vst.msk [vmem:[#allocation0] sm:$0x1] %vm27, %v26
    %s29 = scalar_lea.vmem %s0, 11
    %v30 = vld [vmem:[%s29] sm:$0x1]
    %31 = vrot.lane.b32.xlu0 %v30, 44
    %v32 = vpop.permute.xlu0 %31
    %vm33 = vcmask 392544
    %34 = vst.msk [vmem:[#allocation0] sm:$0x1] %vm33, %v32
    %s35 = scalar_lea.vmem %s0, 10
    %v36 = vld [vmem:[%s35] sm:$0x1]
    %37 = vrot.lane.b32.xlu0 %v36, 40
    %v38 = vpop.permute.xlu0 %37
    %vm39 = vcmask 359744
    %40 = vst.msk [vmem:[#allocation0] sm:$0x1] %vm39, %v38
    %s41 = scalar_lea.vmem %s0, 9
    %v42 = vld [vmem:[%s41] sm:$0x1]
    %43 = vrot.lane.b32.xlu0 %v42, 36
    %v44 = vpop.permute.xlu0 %43
    %vm45 = vcmask 326944
    %46 = vst.msk [vmem:[#allocation0] sm:$0x1] %vm45, %v44
    %s47 = scalar_lea.vmem %s0, 8
    %v48 = vld [vmem:[%s47] sm:$0x1]
    %49 = vrot.lane.b32.xlu0 %v48, 32
    %v50 = vpop.permute.xlu0 %49
    %vm51 = vcmask 294144
    %52 = vst.msk [vmem:[#allocation0] sm:$0x1] %vm51, %v50
    %s53 = scalar_lea.vmem %s0, 7
    %v54 = vld [vmem:[%s53] sm:$0x1]
    %55 = vrot.lane.b32.xlu0 %v54, 28
    %v56 = vpop.permute.xlu0 %55
    %vm57 = vcmask 261344
    %58 = vst.msk [vmem:[#allocation0] sm:$0x1] %vm57, %v56
    %s59 = scalar_lea.vmem %s0, 6
    %v60 = vld [vmem:[%s59] sm:$0x1]
    %61 = vrot.lane.b32.xlu0 %v60, 24
    %v62 = vpop.permute.xlu0 %61
    %vm63 = vcmask 228544
    %64 = vst.msk [vmem:[#allocation0] sm:$0x1] %vm63, %v62
    %s65 = scalar_lea.vmem %s0, 5
    %v66 = vld [vmem:[%s65] sm:$0x1]
    %67 = vrot.lane.b32.xlu0 %v66, 20
    %v68 = vpop.permute.xlu0 %67
    %vm69 = vcmask 195744
    %70 = vst.msk [vmem:[#allocation0] sm:$0x1] %vm69, %v68
    %s71 = scalar_lea.vmem %s0, 4
    %v72 = vld [vmem:[%s71] sm:$0x1]
    %73 = vrot.lane.b32.xlu0 %v72, 16
    %v74 = vpop.permute.xlu0 %73
    %vm75 = vcmask 162944
    %76 = vst.msk [vmem:[#allocation0] sm:$0x1] %vm75, %v74
    %s77 = scalar_lea.vmem %s0, 3
    %v78 = vld [vmem:[%s77] sm:$0x1]
    %79 = vrot.lane.b32.xlu0 %v78, 12
    %v80 = vpop.permute.xlu0 %79
    %vm81 = vcmask 130144
    %82 = vst.msk [vmem:[#allocation0] sm:$0x1] %vm81, %v80
    %s83 = scalar_lea.vmem %s0, 2
    %v84 = vld [vmem:[%s83] sm:$0x1]
    %85 = vrot.lane.b32.xlu0 %v84, 8
    %v86 = vpop.permute.xlu0 %85
    %vm87 = vcmask 97344
    %88 = vst.msk [vmem:[#allocation0] sm:$0x1] %vm87, %v86
    %s89 = scalar_lea.vmem %s0, 1
    %v90 = vld [vmem:[%s89] sm:$0x1]
    %91 = vrot.lane.b32.xlu0 %v90, 4
    %v92 = vpop.permute.xlu0 %91
    %vm93 = vcmask 64544
    %94 = vst.msk [vmem:[#allocation0] sm:$0x1] %vm93, %v92
    %s96 = ssub.s32 2, 1
    %v97 = vld [vmem:[#allocation0] sm:%s96]
    %s99 = ssub.s32 2, 1
    %100 = vst [vmem:[%s1] sm:%s99] %v97

// kernel: tile.19
$region0: #{tile.19}
  %s0 = inlined_call_operand.vmem [shape: f32[16,4], index: 0, kind: input, shape index: {}]
  %s1 = inlined_call_operand.vmem [shape: f32[1,64], index: 1, kind: output, shape index: {}]
  $region1: #{tile.19} parent=0
    #allocation0 [shape = 'u8[4096]{0}', space=vmem, size = 0x1000, scoped, tag = 'scoped mem for output reshape']
    %v2 = vld [vmem:[%s0] sm:$0x1]
    %vm3 = vcmask 31744
    %4 = vst.msk [vmem:[#allocation0] sm:$0x1] %vm3, %v2
    %s5 = scalar_lea.vmem %s0, 15
    %v6 = vld [vmem:[%s5] sm:$0x1]
    %7 = vrot.lane.b32.xlu0 %v6, 60
    %v8 = vpop.permute.xlu0 %7
    %vm9 = vcmask 523744
    %10 = vst.msk [vmem:[#allocation0] sm:$0x1] %vm9, %v8
    %s11 = scalar_lea.vmem %s0, 14
    %v12 = vld [vmem:[%s11] sm:$0x1]
    %13 = vrot.lane.b32.xlu0 %v12, 56
    %v14 = vpop.permute.xlu0 %13
    %vm15 = vcmask 490944
    %16 = vst.msk [vmem:[#allocation0] sm:$0x1] %vm15, %v14
    %s17 = scalar_lea.vmem %s0, 13
    %v18 = vld [vmem:[%s17] sm:$0x1]
    %19 = vrot.lane.b32.xlu0 %v18, 52
    %v20 = vpop.permute.xlu0 %19
    %vm21 = vcmask 458144
    %22 = vst.msk [vmem:[#allocation0] sm:$0x1] %vm21, %v20
    %s23 = scalar_lea.vmem %s0, 12
    %v24 = vld [vmem:[%s23] sm:$0x1]
    %25 = vrot.lane.b32.xlu0 %v24, 48
    %v26 = vpop.permute.xlu0 %25
    %vm27 = vcmask 425344
    %28 = vst.msk [vmem:[#allocation0] sm:$0x1] %vm27, %v26
    %s29 = scalar_lea.vmem %s0, 11
    %v30 = vld [vmem:[%s29] sm:$0x1]
    %31 = vrot.lane.b32.xlu0 %v30, 44
    %v32 = vpop.permute.xlu0 %31
    %vm33 = vcmask 392544
    %34 = vst.msk [vmem:[#allocation0] sm:$0x1] %vm33, %v32
    %s35 = scalar_lea.vmem %s0, 10
    %v36 = vld [vmem:[%s35] sm:$0x1]
    %37 = vrot.lane.b32.xlu0 %v36, 40
    %v38 = vpop.permute.xlu0 %37
    %vm39 = vcmask 359744
    %40 = vst.msk [vmem:[#allocation0] sm:$0x1] %vm39, %v38
    %s41 = scalar_lea.vmem %s0, 9
    %v42 = vld [vmem:[%s41] sm:$0x1]
    %43 = vrot.lane.b32.xlu0 %v42, 36
    %v44 = vpop.permute.xlu0 %43
    %vm45 = vcmask 326944
    %46 = vst.msk [vmem:[#allocation0] sm:$0x1] %vm45, %v44
    %s47 = scalar_lea.vmem %s0, 8
    %v48 = vld [vmem:[%s47] sm:$0x1]
    %49 = vrot.lane.b32.xlu0 %v48, 32
    %v50 = vpop.permute.xlu0 %49
    %vm51 = vcmask 294144
    %52 = vst.msk [vmem:[#allocation0] sm:$0x1] %vm51, %v50
    %s53 = scalar_lea.vmem %s0, 7
    %v54 = vld [vmem:[%s53] sm:$0x1]
    %55 = vrot.lane.b32.xlu0 %v54, 28
    %v56 = vpop.permute.xlu0 %55
    %vm57 = vcmask 261344
    %58 = vst.msk [vmem:[#allocation0] sm:$0x1] %vm57, %v56
    %s59 = scalar_lea.vmem %s0, 6
    %v60 = vld [vmem:[%s59] sm:$0x1]
    %61 = vrot.lane.b32.xlu0 %v60, 24
    %v62 = vpop.permute.xlu0 %61
    %vm63 = vcmask 228544
    %64 = vst.msk [vmem:[#allocation0] sm:$0x1] %vm63, %v62
    %s65 = scalar_lea.vmem %s0, 5
    %v66 = vld [vmem:[%s65] sm:$0x1]
    %67 = vrot.lane.b32.xlu0 %v66, 20
    %v68 = vpop.permute.xlu0 %67
    %vm69 = vcmask 195744
    %70 = vst.msk [vmem:[#allocation0] sm:$0x1] %vm69, %v68
    %s71 = scalar_lea.vmem %s0, 4
    %v72 = vld [vmem:[%s71] sm:$0x1]
    %73 = vrot.lane.b32.xlu0 %v72, 16
    %v74 = vpop.permute.xlu0 %73
    %vm75 = vcmask 162944
    %76 = vst.msk [vmem:[#allocation0] sm:$0x1] %vm75, %v74
    %s77 = scalar_lea.vmem %s0, 3
    %v78 = vld [vmem:[%s77] sm:$0x1]
    %79 = vrot.lane.b32.xlu0 %v78, 12
    %v80 = vpop.permute.xlu0 %79
    %vm81 = vcmask 130144
    %82 = vst.msk [vmem:[#allocation0] sm:$0x1] %vm81, %v80
    %s83 = scalar_lea.vmem %s0, 2
    %v84 = vld [vmem:[%s83] sm:$0x1]
    %85 = vrot.lane.b32.xlu0 %v84, 8
    %v86 = vpop.permute.xlu0 %85
    %vm87 = vcmask 97344
    %88 = vst.msk [vmem:[#allocation0] sm:$0x1] %vm87, %v86
    %s89 = scalar_lea.vmem %s0, 1
    %v90 = vld [vmem:[%s89] sm:$0x1]
    %91 = vrot.lane.b32.xlu0 %v90, 4
    %v92 = vpop.permute.xlu0 %91
    %vm93 = vcmask 64544
    %94 = vst.msk [vmem:[#allocation0] sm:$0x1] %vm93, %v92
    %s96 = ssub.s32 2, 1
    %v97 = vld [vmem:[#allocation0] sm:%s96]
    %s99 = ssub.s32 2, 1
    %100 = vst [vmem:[%s1] sm:%s99] %v97

// kernel: conv_module_forward.1
$region0: #{conv_module_forward.1}
  #allocation0 [shape = 'u32[]', space=smem, size = 0x4, offset = 0x4, fixed_abs, tag = 'smem constant byte address 0x4 - core index']
  #allocation1 [shape = 'u32[72,128]{1,0:T(1,128)}', space=vmem, size = 0x9000, scoped, tag = 'internal scratch']
  %s0 = inlined_call_operand.vmem [shape: f32[2,18,72], index: 0, kind: input, shape index: {}]
  %s1 = inlined_call_operand.vmem [shape: f32[216,72], index: 1, kind: input, shape index: {}]
  %s2 = inlined_call_operand.vmem [shape: f32[1,72], index: 2, kind: input, shape index: {}]
  %s3 = inlined_call_operand.vmem [shape: f32[216,64], index: 3, kind: input, shape index: {}]
  %s4 = inlined_call_operand.vmem [shape: f32[1,64], index: 4, kind: input, shape index: {}]
  %s5 = inlined_call_operand.vmem [shape: f32[2,16,64], index: 5, kind: output, shape index: {}]
  %s6 = sld [smem:[#allocation0]]
  $region53: #{conv_module_forward.1} parent=0
    _
  %s8 = ssub.s32 1, %s6
  %s9 = scalar_select 0, %s8, %s6
  loop: start=0, step=1, limit=4
  $region2: #{conv_module_forward.1} parent=0 // loop_pre_header
    _
  $region3: #{conv_module_forward.1} parent=0 // loop_header
    %s11 = sphi 0, %s15
    %p12 = scmp.ge.s32.totalorder %s11, 4
    %s21 = sphi 0, %s23
    %s24 = sphi 0, %s21
    %s25 = sphi 0, %s24
    %s41 = sphi 0, %s25
    %s45 = sphi 0, %s45
    %s47 = sphi 0, %s45
    %s48 = sphi 0, %s47
    %s62 = sphi 0, %s48
    %s66 = sphi 0, %s66
    %s68 = sphi 0, %s66
    %s69 = sphi 0, %s68
    %s83 = sphi 0, %s69
    %s87 = sphi 0, %s87
    %s89 = sphi 0, %s87
    %s90 = sphi 0, %s89
    %s104 = sphi 0, %s90
    %s108 = sphi 0, %s108
    %s110 = sphi 0, %s108
    %s111 = sphi 0, %s110
    %s125 = sphi 0, %s111
    %s131 = sphi 0, %s133
    %s134 = sphi 0, %s131
    %s135 = sphi 0, %s134
    %s151 = sphi 0, %s135
  $region4: #{conv_module_forward.1} parent=0 // loop_header_branch
    %14 = sbr.rel (%p12) target = $region8
  $region5: #{conv_module_forward.1} parent=0 // loop_body
    %s16 = ssub.s32 %s11, 1
    %s17 = ssub.s32 %s11, 2
    %s18 = sadd.s32 %s11, 1
    %s19 = ssub.s32 %s11, %s18
    %p20 = scmp.eq.s32.totalorder %s19, 0
    %s22 = sadd.s32 %s21, 1
    %s23 = scalar_select %p20, %s21, %s22
    %p26 = pneg %p20
    %p27 = scmp.eq.s32.totalorder %s11, 1
    %p28 = por %p26, %p27
    %p29 = scmp.ne.s32.totalorder %s21, %s24
    %p30 = scmp.eq.s32.totalorder %s11, 0
    %p31 = por %p29, %p30
    %p32 = scmp.ne.s32.totalorder %s21, %s24
    %p33 = scmp.eq.s32.totalorder %s16, 1
    %p34 = por %p32, %p33
    %p35 = scmp.ne.s32.totalorder %s24, %s25
    %p36 = scmp.eq.s32.totalorder %s16, 0
    %p37 = por %p35, %p36
    %p38 = scmp.ne.s32.totalorder %s24, %s25
    %p39 = scmp.eq.s32.totalorder %s17, 1
    %p40 = por %p38, %p39
    %p42 = scmp.ne.s32.totalorder %s25, %s41
    %p43 = scmp.eq.s32.totalorder %s17, 0
    %p44 = por %p42, %p43
    %s46 = sadd.s32 %s45, 1
    %p49 = scmp.eq.s32.totalorder %s11, 1
    %p50 = scmp.ne.s32.totalorder %s45, %s47
    %p51 = scmp.eq.s32.totalorder %s11, 0
    %p52 = por %p50, %p51
    %p53 = scmp.ne.s32.totalorder %s45, %s47
    %p54 = scmp.eq.s32.totalorder %s16, 1
    %p55 = por %p53, %p54
    %p56 = scmp.ne.s32.totalorder %s47, %s48
    %p57 = scmp.eq.s32.totalorder %s16, 0
    %p58 = por %p56, %p57
    %p59 = scmp.ne.s32.totalorder %s47, %s48
    %p60 = scmp.eq.s32.totalorder %s17, 1
    %p61 = por %p59, %p60
    %p63 = scmp.ne.s32.totalorder %s48, %s62
    %p64 = scmp.eq.s32.totalorder %s17, 0
    %p65 = por %p63, %p64
    %s67 = sadd.s32 %s66, 1
    %p70 = scmp.eq.s32.totalorder %s11, 1
    %p71 = scmp.ne.s32.totalorder %s66, %s68
    %p72 = scmp.eq.s32.totalorder %s11, 0
    %p73 = por %p71, %p72
    %p74 = scmp.ne.s32.totalorder %s66, %s68
    %p75 = scmp.eq.s32.totalorder %s16, 1
    %p76 = por %p74, %p75
    %p77 = scmp.ne.s32.totalorder %s68, %s69
    %p78 = scmp.eq.s32.totalorder %s16, 0
    %p79 = por %p77, %p78
    %p80 = scmp.ne.s32.totalorder %s68, %s69
    %p81 = scmp.eq.s32.totalorder %s17, 1
    %p82 = por %p80, %p81
    %p84 = scmp.ne.s32.totalorder %s69, %s83
    %p85 = scmp.eq.s32.totalorder %s17, 0
    %p86 = por %p84, %p85
    %s88 = sadd.s32 %s87, 1
    %p91 = scmp.eq.s32.totalorder %s11, 1
    %p92 = scmp.ne.s32.totalorder %s87, %s89
    %p93 = scmp.eq.s32.totalorder %s11, 0
    %p94 = por %p92, %p93
    %p95 = scmp.ne.s32.totalorder %s87, %s89
    %p96 = scmp.eq.s32.totalorder %s16, 1
    %p97 = por %p95, %p96
    %p98 = scmp.ne.s32.totalorder %s89, %s90
    %p99 = scmp.eq.s32.totalorder %s16, 0
    %p100 = por %p98, %p99
    %p101 = scmp.ne.s32.totalorder %s89, %s90
    %p102 = scmp.eq.s32.totalorder %s17, 1
    %p103 = por %p101, %p102
    %p105 = scmp.ne.s32.totalorder %s90, %s104
    %p106 = scmp.eq.s32.totalorder %s17, 0
    %p107 = por %p105, %p106
    %s109 = sadd.s32 %s108, 1
    %p112 = scmp.eq.s32.totalorder %s11, 1
    %p113 = scmp.ne.s32.totalorder %s108, %s110
    %p114 = scmp.eq.s32.totalorder %s11, 0
    %p115 = por %p113, %p114
    %p116 = scmp.ne.s32.totalorder %s108, %s110
    %p117 = scmp.eq.s32.totalorder %s16, 1
    %p118 = por %p116, %p117
    %p119 = scmp.ne.s32.totalorder %s110, %s111
    %p120 = scmp.eq.s32.totalorder %s16, 0
    %p121 = por %p119, %p120
    %p122 = scmp.ne.s32.totalorder %s110, %s111
    %p123 = scmp.eq.s32.totalorder %s17, 1
    %p124 = por %p122, %p123
    %p126 = scmp.ne.s32.totalorder %s111, %s125
    %p127 = scmp.eq.s32.totalorder %s17, 0
    %p128 = por %p126, %p127
    %s129 = ssub.s32 %s11, %s18
    %p130 = scmp.eq.s32.totalorder %s129, 0
    %s132 = sadd.s32 %s131, 1
    %s133 = scalar_select %p130, %s131, %s132
    %p136 = pneg %p130
    %p137 = scmp.eq.s32.totalorder %s11, 1
    %p138 = por %p136, %p137
    %p139 = scmp.ne.s32.totalorder %s131, %s134
    %p140 = scmp.eq.s32.totalorder %s11, 0
    %p141 = por %p139, %p140
    %p142 = scmp.ne.s32.totalorder %s131, %s134
    %p143 = scmp.eq.s32.totalorder %s16, 1
    %p144 = por %p142, %p143
    %p145 = scmp.ne.s32.totalorder %s134, %s135
    %p146 = scmp.eq.s32.totalorder %s16, 0
    %p147 = por %p145, %p146
    %p148 = scmp.ne.s32.totalorder %s134, %s135
    %p149 = scmp.eq.s32.totalorder %s17, 1
    %p150 = por %p148, %p149
    %p152 = scmp.ne.s32.totalorder %s135, %s151
    %p153 = scmp.eq.s32.totalorder %s17, 0
    %p154 = por %p152, %p153
    %p155 = scmp.le.s32.totalorder 1, %s11
    %p156 = scmp.lt.s32.totalorder %s11, 3
    %p157 = pnand %p155, %p156
    %p158 = pneg %p157
    // Predicated region
    $region9: #{conv_module_forward.1} parent=5 // pred_check
      _
    $region10: #{conv_module_forward.1} parent=5 // pred_check_branch
      %160 = sbr.rel (%p157) target = $region12
    $region11: #{conv_module_forward.1} parent=5 // pred_region
      %s161 = ssub.s32 %s11, 1
      // Predicated region
      $region13: #{conv_module_forward.1} parent=11 // pred_check
        %p162 = pneg %p58
      $region14: #{conv_module_forward.1} parent=11 // pred_check_branch
        %164 = sbr.rel (%p162) target = $region16
      $region15: #{conv_module_forward.1} parent=11 // pred_region
        _
      $region16: #{conv_module_forward.1} parent=11 // pred_fallthru
        _
      // Predicated region
      $region17: #{conv_module_forward.1} parent=11 // pred_check
        %p165 = pneg %p79
      $region18: #{conv_module_forward.1} parent=11 // pred_check_branch
        %167 = sbr.rel (%p165) target = $region20
      $region19: #{conv_module_forward.1} parent=11 // pred_region
        _
      $region20: #{conv_module_forward.1} parent=11 // pred_fallthru
        _
      // Predicated region
      $region21: #{conv_module_forward.1} parent=11 // pred_check
        %p168 = pneg %p100
      $region22: #{conv_module_forward.1} parent=11 // pred_check_branch
        %170 = sbr.rel (%p168) target = $region24
      $region23: #{conv_module_forward.1} parent=11 // pred_region
        _
      $region24: #{conv_module_forward.1} parent=11 // pred_fallthru
        _
      // Predicated region
      $region25: #{conv_module_forward.1} parent=11 // pred_check
        %p171 = pneg %p121
      $region26: #{conv_module_forward.1} parent=11 // pred_check_branch
        %173 = sbr.rel (%p171) target = $region28
      $region27: #{conv_module_forward.1} parent=11 // pred_region
        _
      $region28: #{conv_module_forward.1} parent=11 // pred_fallthru
        _
    $region12: #{conv_module_forward.1} parent=5 // pred_fallthru
      _
    %p174 = scmp.lt.s32.totalorder %s11, 2
    // Predicated region
    $region29: #{conv_module_forward.1} parent=5 // pred_check
      %p175 = pneg %p174
    $region30: #{conv_module_forward.1} parent=5 // pred_check_branch
      %177 = sbr.rel (%p175) target = $region32
    $region31: #{conv_module_forward.1} parent=5 // pred_region
      // Predicated region
      $region33: #{conv_module_forward.1} parent=31 // pred_check
        %p178 = pneg %p31
      $region34: #{conv_module_forward.1} parent=31 // pred_check_branch
        %180 = sbr.rel (%p178) target = $region36
      $region35: #{conv_module_forward.1} parent=31 // pred_region
        %p181 = scmp.lt.s32.totalorder %s11, 1
        %s182 = scalar_select %p181, %s11, 1
        %s183 = smul.addr %s182, 3
        %s184 = smul.addr %s183, 8
        %s185 = scalar_lea.vmem %s0, %s184
      $region36: #{conv_module_forward.1} parent=31 // pred_fallthru
        _
    $region32: #{conv_module_forward.1} parent=5 // pred_fallthru
      _
    %p186 = scmp.le.s32.totalorder 1, %s11
    %p187 = scmp.lt.s32.totalorder %s11, 3
    %p188 = pnand %p186, %p187
    %p189 = pneg %p188
    // Predicated region
    $region37: #{conv_module_forward.1} parent=5 // pred_check
      _
    $region38: #{conv_module_forward.1} parent=5 // pred_check_branch
      %191 = sbr.rel (%p188) target = $region40
    $region39: #{conv_module_forward.1} parent=5 // pred_region
      %s192 = ssub.s32 %s11, 1
      %p193 = scmp.lt.s32.totalorder %s16, 1
      %s194 = scalar_select %p193, %s16, 1
      %s195 = smul.addr %s194, 3
      %s196 = smul.addr %s195, 8
      %s197 = scalar_lea.vmem %s0, %s196
      %p198 = pneg %p37
      %p199 = pneg %p34
      %p200 = pneg %p58
      %p201 = pneg %p55
      %p202 = pneg %p79
      %p203 = pneg %p76
      %p204 = pneg %p100
      %p205 = pneg %p97
      %p206 = pneg %p121
      %p207 = pneg %p118
      %p208 = pneg %p147
      %p209 = pneg %p144
      %p210 = scmp.lt.s32.totalorder %s16, 1
      %s211 = scalar_select %p210, %s16, 1
      %s212 = smul.addr %s211, 2
      %s213 = smul.addr %s212, 8
      %s214 = scalar_lea.vmem %s5, %s213
      %p215 = scmp.lt.s32.totalorder %s16, 1
      %s216 = scalar_select %p215, %s16, 1
      %s217 = smul.addr %s216, 3
      %s218 = smul.addr %s217, 8
      %s219 = scalar_lea.vmem %s0, %s218
      %p220 = scmp.lt.s32.totalorder %s16, 1
      %s221 = scalar_select %p220, %s16, 1
      %s222 = smul.addr %s221, 2
      %s223 = smul.addr %s222, 8
      %s224 = scalar_lea.vmem %s5, %s223
      %v225 = vld [vmem:[%s219] sm:$0xff]
      %v226 = vld [vmem:[%s219 + $0x8] sm:$0xff]
      %v227 = vld [vmem:[%s219 + $0x10] sm:$0x3]
      %vm231 = vcmask 1046528
      %v232 = vrot.slane %v225, 1
      %v233 = vrot.slane %v226, 1
      %v234 = vsel %vm231, %v232, %v233
      %v235 = vrot.slane %v227, 1
      %v236 = vsel %vm231, %v233, %v235
      %237 = vrot.lane.b32.xlu0 %v234, 72
      %v238 = vpop.permute.xlu0 %237
      %239 = vrot.lane.b32.xlu0 %v236, 72
      %v240 = vpop.permute.xlu0 %239
      %vm243 = vcmask 1045504
      %v244 = vrot.slane %v225, 2
      %v245 = vrot.slane %v226, 2
      %v246 = vsel %vm243, %v244, %v245
      %v247 = vrot.slane %v227, 2
      %v248 = vsel %vm243, %v245, %v247
      %249 = vrot.lane.b32.xlu0 %v246, 16
      %v250 = vpop.permute.xlu0 %249
      %251 = vrot.lane.b32.xlu0 %v248, 16
      %v252 = vpop.permute.xlu0 %251
      %vm255 = vcmask 588800
      %v256 = vsel %vm255, %v225, %v238
      %v257 = vsel %vm255, %v226, %v240
      %vm258 = vcmask 130048
      %v259 = vsel %vm258, %v238, %v250
      %v260 = vsel %vm258, %v240, %v252
      %v261 = vld [vmem:[%s1] sm:$0xff]
      %v262 = vld [vmem:[%s1 + $0x8] sm:$0xff]
      %v263 = vld [vmem:[%s1 + $0x10] sm:$0xff]
      %v264 = vld [vmem:[%s1 + $0x18] sm:$0xff]
      %v265 = vld [vmem:[%s1 + $0x20] sm:$0xff]
      %v266 = vld [vmem:[%s1 + $0x28] sm:$0xff]
      %v267 = vld [vmem:[%s1 + $0x30] sm:$0xff]
      %v268 = vld [vmem:[%s1 + $0x38] sm:$0xff]
      %v269 = vld [vmem:[%s1 + $0x40] sm:$0xff]
      %v270 = vld [vmem:[%s1 + $0x48] sm:$0xff]
      %v271 = vld [vmem:[%s1 + $0x50] sm:$0xff]
      %v272 = vld [vmem:[%s1 + $0x58] sm:$0xff]
      %v273 = vld [vmem:[%s1 + $0x60] sm:$0xff]
      %v274 = vld [vmem:[%s1 + $0x68] sm:$0xff]
      %v275 = vld [vmem:[%s1 + $0x70] sm:$0xff]
      %v276 = vld [vmem:[%s1 + $0x78] sm:$0xff]
      %v277 = vld [vmem:[%s1 + $0x80] sm:$0xff]
      %v278 = vld [vmem:[%s1 + $0x88] sm:$0xff]
      %v279 = vld [vmem:[%s1 + $0x90] sm:$0xff]
      %v280 = vld [vmem:[%s1 + $0x98] sm:$0xff]
      %v281 = vld [vmem:[%s1 + $0xa0] sm:$0xff]
      %v282 = vld [vmem:[%s1 + $0xa8] sm:$0xff]
      %v283 = vld [vmem:[%s1 + $0xb0] sm:$0xff]
      %v284 = vld [vmem:[%s1 + $0xb8] sm:$0xff]
      %v285 = vld [vmem:[%s1 + $0xc0] sm:$0xff]
      %v286 = vld [vmem:[%s1 + $0xc8] sm:$0xff]
      %v287 = vld [vmem:[%s1 + $0xd0] sm:$0xff]
      %v288 = vld [vmem:[%s2] sm:$0x1]
      %v290 = vperm.slane %v288, 0
      %vm292 = vcmask 719872
      %v294 = vsel %vm292, %v259, 0
      %v297 = vsel %vm292, %v260, 0
      %299 = vmatpush.msra.mxu0 %v276
      %300 = vmatpush.msra.mxu0 %v275
      %301 = vmatpush.msra.mxu0 %v274
      %302 = vmatpush.msra.mxu0 %v273
      %303 = vmatpush.msra.mxu0 %v272
      %304 = vmatpush.msra.mxu0 %v271
      %305 = vmatpush.msra.mxu0 %v270
      %306 = vmatpush.msra.mxu0 %v269
      %307 = vmatpush.msra.mxu0 %v268
      %308 = vmatpush.msra.mxu0 %v267
      %309 = vmatpush.msra.mxu0 %v266
      %310 = vmatpush.msra.mxu0 %v265
      %311 = vmatpush.msra.mxu0 %v264
      %312 = vmatpush.msra.mxu0 %v263
      %313 = vmatpush.msra.mxu0 %v262
      %314 = vmatpush.msra.mxu0 %v261
      %315 = vmatmul.f32.gmra.mxu0 %v256
      %v316 = vpop.f32.mrf.mxu0
      %v317 = vadd.f32 %v290, %v316
      %318 = vmatmul.f32.gmra.mxu0 %v257
      %v319 = vpop.f32.mrf.mxu0
      %v320 = vadd.f32 %v290, %v319
      %321 = vdwg.mxu0
      %322 = vmatpush.msra.mxu0 0.0
      %323 = vmatpush.msra.mxu0 0.0
      %324 = vmatpush.msra.mxu0 0.0
      %325 = vmatpush.msra.mxu0 0.0
      %326 = vmatpush.msra.mxu0 0.0
      %327 = vmatpush.msra.mxu0 %v287
      %328 = vmatpush.msra.mxu0 %v286
      %329 = vmatpush.msra.mxu0 %v285
      %330 = vmatpush.msra.mxu0 %v284
      %331 = vmatpush.msra.mxu0 %v283
      %332 = vmatpush.msra.mxu0 %v282
      %333 = vmatpush.msra.mxu0 %v281
      %334 = vmatpush.msra.mxu0 %v280
      %335 = vmatpush.msra.mxu0 %v279
      %336 = vmatpush.msra.mxu0 %v278
      %337 = vmatpush.msra.mxu0 %v277
      %338 = vmatmul.f32.gmra.mxu0 %v294
      %v339 = vpop.f32.mrf.mxu0
      %v340 = vadd.f32 %v317, %v339
      %341 = vmatmul.f32.gmra.mxu0 %v297
      %v342 = vpop.f32.mrf.mxu0
      %v343 = vadd.f32 %v320, %v342
      %344 = vdwg.mxu0
      %vm345 = vcmp.ge.f32.partialorder %v340, 0.0
      %vm346 = vcmp.ge.f32.partialorder %v343, 0.0
      %v347 = vmul.f32 %v340, 0.1
      %v348 = vmul.f32 %v343, 0.1
      %v349 = vsel %vm345, %v340, %v347
      %v350 = vsel %vm346, %v343, %v348
      %vm353 = vcmask 1040384
      %v354 = vrot.slane %v349, 7
      %v355 = vrot.slane %v350, 7
      %v356 = vsel %vm353, %v354, %v355
      %v360 = vsel %vm353, 0.0, %v354
      %v361 = vsel %vm353, %v355, 0.0
      %v364 = vrot.slane %v360, 1
      %v365 = vrot.slane %v356, 1
      %v366 = vsel %vm231, %v364, %v365
      %v367 = vrot.slane %v361, 1
      %v368 = vsel %vm231, %v365, %v367
      %369 = vrot.lane.b32.xlu0 %v366, 72
      %v370 = vpop.permute.xlu0 %369
      %371 = vrot.lane.b32.xlu0 %v368, 72
      %v372 = vpop.permute.xlu0 %371
      %v375 = vrot.slane %v360, 2
      %v376 = vrot.slane %v356, 2
      %v377 = vsel %vm243, %v375, %v376
      %v378 = vrot.slane %v361, 2
      %v379 = vsel %vm243, %v376, %v378
      %380 = vrot.lane.b32.xlu0 %v377, 16
      %v381 = vpop.permute.xlu0 %380
      %382 = vrot.lane.b32.xlu0 %v379, 16
      %v383 = vpop.permute.xlu0 %382
      %v386 = vsel %vm255, %v360, %v370
      %v387 = vsel %vm255, %v356, %v372
      %v388 = vsel %vm258, %v370, %v381
      %v389 = vsel %vm258, %v372, %v383
      %v390 = vld [vmem:[%s3] sm:$0xff]
      %v391 = vld [vmem:[%s3 + $0x8] sm:$0xff]
      %v392 = vld [vmem:[%s3 + $0x10] sm:$0xff]
      %v393 = vld [vmem:[%s3 + $0x18] sm:$0xff]
      %v394 = vld [vmem:[%s3 + $0x20] sm:$0xff]
      %v395 = vld [vmem:[%s3 + $0x28] sm:$0xff]
      %v396 = vld [vmem:[%s3 + $0x30] sm:$0xff]
      %v397 = vld [vmem:[%s3 + $0x38] sm:$0xff]
      %v398 = vld [vmem:[%s3 + $0x40] sm:$0xff]
      %v399 = vld [vmem:[%s3 + $0x48] sm:$0xff]
      %v400 = vld [vmem:[%s3 + $0x50] sm:$0xff]
      %v401 = vld [vmem:[%s3 + $0x58] sm:$0xff]
      %v402 = vld [vmem:[%s3 + $0x60] sm:$0xff]
      %v403 = vld [vmem:[%s3 + $0x68] sm:$0xff]
      %v404 = vld [vmem:[%s3 + $0x70] sm:$0xff]
      %v405 = vld [vmem:[%s3 + $0x78] sm:$0xff]
      %v406 = vld [vmem:[%s3 + $0x80] sm:$0xff]
      %v407 = vld [vmem:[%s3 + $0x88] sm:$0xff]
      %v408 = vld [vmem:[%s3 + $0x90] sm:$0xff]
      %v409 = vld [vmem:[%s3 + $0x98] sm:$0xff]
      %v410 = vld [vmem:[%s3 + $0xa0] sm:$0xff]
      %v411 = vld [vmem:[%s3 + $0xa8] sm:$0xff]
      %v412 = vld [vmem:[%s3 + $0xb0] sm:$0xff]
      %v413 = vld [vmem:[%s3 + $0xb8] sm:$0xff]
      %v414 = vld [vmem:[%s3 + $0xc0] sm:$0xff]
      %v415 = vld [vmem:[%s3 + $0xc8] sm:$0xff]
      %v416 = vld [vmem:[%s3 + $0xd0] sm:$0xff]
      %v417 = vld [vmem:[%s4] sm:$0x1]
      %v419 = vperm.slane %v417, 0
      %v422 = vsel %vm292, %v388, 0
      %v425 = vsel %vm292, %v389, 0
      %427 = vmatpush.msra.mxu0 %v405
      %428 = vmatpush.msra.mxu0 %v404
      %429 = vmatpush.msra.mxu0 %v403
      %430 = vmatpush.msra.mxu0 %v402
      %431 = vmatpush.msra.mxu0 %v401
      %432 = vmatpush.msra.mxu0 %v400
      %433 = vmatpush.msra.mxu0 %v399
      %434 = vmatpush.msra.mxu0 %v398
      %435 = vmatpush.msra.mxu0 %v397
      %436 = vmatpush.msra.mxu0 %v396
      %437 = vmatpush.msra.mxu0 %v395
      %438 = vmatpush.msra.mxu0 %v394
      %439 = vmatpush.msra.mxu0 %v393
      %440 = vmatpush.msra.mxu0 %v392
      %441 = vmatpush.msra.mxu0 %v391
      %442 = vmatpush.msra.mxu0 %v390
      %443 = vmatmul.f32.gmra.mxu0 %v386
      %v444 = vpop.f32.mrf.mxu0
      %v445 = vadd.f32 %v419, %v444
      %446 = vmatmul.f32.gmra.mxu0 %v387
      %v447 = vpop.f32.mrf.mxu0
      %v448 = vadd.f32 %v419, %v447
      %449 = vdwg.mxu0
      %450 = vmatpush.msra.mxu0 0.0
      %451 = vmatpush.msra.mxu0 0.0
      %452 = vmatpush.msra.mxu0 0.0
      %453 = vmatpush.msra.mxu0 0.0
      %454 = vmatpush.msra.mxu0 0.0
      %455 = vmatpush.msra.mxu0 %v416
      %456 = vmatpush.msra.mxu0 %v415
      %457 = vmatpush.msra.mxu0 %v414
      %458 = vmatpush.msra.mxu0 %v413
      %459 = vmatpush.msra.mxu0 %v412
      %460 = vmatpush.msra.mxu0 %v411
      %461 = vmatpush.msra.mxu0 %v410
      %462 = vmatpush.msra.mxu0 %v409
      %463 = vmatpush.msra.mxu0 %v408
      %464 = vmatpush.msra.mxu0 %v407
      %465 = vmatpush.msra.mxu0 %v406
      %466 = vmatmul.f32.gmra.mxu0 %v422
      %v467 = vpop.f32.mrf.mxu0
      %v468 = vadd.f32 %v445, %v467
      %469 = vmatmul.f32.gmra.mxu0 %v425
      %v470 = vpop.f32.mrf.mxu0
      %v471 = vadd.f32 %v448, %v470
      %472 = vdwg.mxu0
      %vm473 = vcmp.ge.f32.partialorder %v468, 0.0
      %vm474 = vcmp.ge.f32.partialorder %v471, 0.0
      %v475 = vmul.f32 %v468, 0.1
      %v476 = vmul.f32 %v471, 0.1
      %v477 = vsel %vm473, %v468, %v475
      %v478 = vsel %vm474, %v471, %v476
      %vm479 = vcmask 523264
      %480 = vst.msk [vmem:[%s224] sm:$0xff] %vm479, %v477
      %481 = vst.msk [vmem:[%s224 + $0x8] sm:$0xff] %vm479, %v478
      %p482 = scmp.lt.s32.totalorder %s16, 1
      %s483 = scalar_select %p482, %s16, 1
      %s484 = smul.addr %s483, 2
      %s485 = smul.addr %s484, 8
      %s486 = scalar_lea.vmem %s5, %s485
      // Predicated region
      $region41: #{conv_module_forward.1} parent=39 // pred_check
        %p487 = pneg %p144
      $region42: #{conv_module_forward.1} parent=39 // pred_check_branch
        %489 = sbr.rel (%p487) target = $region44
      $region43: #{conv_module_forward.1} parent=39 // pred_region
        _
      $region44: #{conv_module_forward.1} parent=39 // pred_fallthru
        _
    $region40: #{conv_module_forward.1} parent=5 // pred_fallthru
      _
    %p490 = scmp.le.s32.totalorder 2, %s11
    // Predicated region
    $region45: #{conv_module_forward.1} parent=5 // pred_check
      %p491 = pneg %p490
    $region46: #{conv_module_forward.1} parent=5 // pred_check_branch
      %493 = sbr.rel (%p491) target = $region48
    $region47: #{conv_module_forward.1} parent=5 // pred_region
      %s494 = ssub.s32 %s11, 2
      // Predicated region
      $region49: #{conv_module_forward.1} parent=47 // pred_check
        %p495 = pneg %p150
      $region50: #{conv_module_forward.1} parent=47 // pred_check_branch
        %497 = sbr.rel (%p495) target = $region52
      $region51: #{conv_module_forward.1} parent=47 // pred_region
        %p498 = scmp.lt.s32.totalorder %s17, 1
        %s499 = scalar_select %p498, %s17, 1
        %s500 = smul.addr %s499, 2
        %s501 = smul.addr %s500, 8
        %s502 = scalar_lea.vmem %s5, %s501
      $region52: #{conv_module_forward.1} parent=47 // pred_fallthru
        _
    $region48: #{conv_module_forward.1} parent=5 // pred_fallthru
      _
  $region6: #{conv_module_forward.1} parent=0 // loop_footer
    %s15 = sadd.s32 1, %s11
  $region7: #{conv_module_forward.1} parent=0 // loop_footer_branch
    %10 = sbr.rel target = $region3
  $region8: #{conv_module_forward.1} parent=0 // loop_exit
    _

</llo_original>
